<compile_context>
chip_gen: v5e
topology: v5e:2x2
jax: 0.10.0
libtpu: 0.0.40
codegen_flags: <defaults>
</compile_context>

<pallas_src>
import math

import jax
import jax.numpy as jnp
import numpy as np
from jax.experimental import pallas as pl
from jax.experimental.pallas import tpu as pltpu


def _headwise_matmul_kernel(x_ref, w_ref, b_ref, o_ref):
    # x_ref: (tile_rows, P*dim)   w_ref: (P*dim, P*out_dim)   b_ref: (1, P*out_dim)
    # One lane-dense MXU matmul with f32 accumulation; bias add in f32; single cast.
    y = jnp.dot(x_ref[...], w_ref[...], preferred_element_type=jnp.float32)
    y = y + b_ref[...].astype(jnp.float32)
    o_ref[...] = y.astype(o_ref.dtype)


def _block_diag_weight(weight):
    """(nh, out_d, d) -> (nh*d, nh*out_d) block-diagonal with head h's W[h]^T on block h."""
    nh, out_d, d = weight.shape
    eye = jnp.eye(nh, dtype=weight.dtype)
    # result[h*d+i, g*out_d+j] = delta(h,g) * W[h, j, i]
    return jnp.einsum('hg,hji->higj', eye, weight).reshape(nh * d, nh * out_d)


def linear_headwise_expand(x, weight, bias=None, *, tile_rows=None):
    """Pallas implementation of LinearHeadwiseExpand.forward.

    x:      (..., dim)                       channel-last
    weight: (num_heads, dim_per_head, dim_per_head)
    bias:   optional (dim,)
    """
    orig_shape = x.shape
    dim = orig_shape[-1]
    nh, out_d, d = weight.shape
    assert nh * d == dim, "dim must equal num_heads * dim_per_head"
    out_dim = nh * out_d

    # --- weight prep (pure JAX, once, outside the kernel) ---------------------
    w_bd = _block_diag_weight(weight)                       # (dim, out_dim)

    # Token packing factor so that both lane dims become multiples of 128.
    if dim == out_dim and dim < 128 and (128 % dim) == 0:
        pack = 128 // dim
    else:
        pack = 1
    if pack > 1:
        eye_p = jnp.eye(pack, dtype=w_bd.dtype)
        # packed[p*dim+i, q*out_dim+j] = delta(p,q) * w_bd[i, j]
        w_packed = jnp.einsum('pq,io->piqo', eye_p, w_bd).reshape(
            pack * dim, pack * out_dim)
    else:
        w_packed = w_bd

    if bias is None:
        b_packed = jnp.zeros((1, pack * out_dim), dtype=jnp.float32)
    else:
        b_packed = jnp.tile(bias.reshape(1, out_dim).astype(jnp.float32), (1, pack))

    # --- input packing / tiling ----------------------------------------------
    x2 = x.reshape(-1, dim)
    m_tokens = x2.shape[0]
    rows = pl.cdiv(m_tokens, pack)            # packed rows needed

    if tile_rows is None:
        tile_rows = 512                       # ~256 KiB per block at f32, 128 lanes
    if rows <= tile_rows:
        tile_rows = max(rows, 1)              # single block == full array (any row count)
        n_tiles = 1
    else:
        tile_rows = max(8, (tile_rows // 8) * 8)   # sublane-aligned tiles
        n_tiles = pl.cdiv(rows, tile_rows)

    rows_total = n_tiles * tile_rows
    m_total = rows_total * pack
    if m_total != m_tokens:
        x2 = jnp.pad(x2, ((0, m_total - m_tokens), (0, 0)))
    xp = x2.reshape(rows_total, pack * dim)

    # --- pallas call ----------------------------------------------------------
    out = pl.pallas_call(
        _headwise_matmul_kernel,
        out_shape=jax.ShapeDtypeStruct((rows_total, pack * out_dim), x.dtype),
        grid=(n_tiles,),
        in_specs=[
            pl.BlockSpec((tile_rows, pack * dim), lambda i: (i, 0)),
            pl.BlockSpec((pack * dim, pack * out_dim), lambda i: (0, 0)),
            pl.BlockSpec((1, pack * out_dim), lambda i: (0, 0)),
        ],
        out_specs=pl.BlockSpec((tile_rows, pack * out_dim), lambda i: (i, 0)),
        compiler_params=pltpu.CompilerParams(
            # Each grid step writes a disjoint output tile -> safe to shard across
            # TensorCores (v7x megacore); harmless on single-TC v5e/v6e.
            dimension_semantics=("parallel",),
        ),
    )(xp, w_packed, b_packed)

    out = out.reshape(rows_total * pack, out_dim)[:m_tokens]
    return out.reshape(*orig_shape[:-1], out_dim)


def _reference(x, weight, bias=None):
    nh, out_d, d = weight.shape
    xh = x.reshape(*x.shape[:-1], nh, d)
    y = jnp.einsum('...nd,nod->...no', xh, weight)
    y = y.reshape(*x.shape[:-1], nh * out_d)
    if bias is not None:
        y = y + bias
    return y


if __name__ == "__main__":
    # Module config: dim=32, num_heads=4 -> dim_per_head=8. Input (B=2, S=8, dim=32).
    dim = 32
    num_heads = 4
    dim_per_head = dim // num_heads
    B, S = 2, 8

    key = jax.random.PRNGKey(0)
    kx, kw, kb, kx2 = jax.random.split(key, 4)

    x = jax.random.normal(kx, (B, S, dim), dtype=jnp.float32)
    # nn.init.normal_(weight, mean=0.0, std=sqrt(2/5/dim_per_head))
    w_std = math.sqrt(2.0 / 5.0 / dim_per_head)
    weight = w_std * jax.random.normal(
        kw, (num_heads, dim_per_head, dim_per_head), dtype=jnp.float32)

    # No-bias path (module default bias=False).
    out = jax.block_until_ready(linear_headwise_expand(x, weight))
    np.testing.assert_allclose(np.asarray(out), np.asarray(_reference(x, weight)),
                               rtol=1e-4, atol=1e-4)

    # Bias path.
    bias = 0.1 * jax.random.normal(kb, (dim,), dtype=jnp.float32)
    out_b = jax.block_until_ready(linear_headwise_expand(x, weight, bias))
    np.testing.assert_allclose(np.asarray(out_b), np.asarray(_reference(x, weight, bias)),
                               rtol=1e-4, atol=1e-4)

    # Ragged token count (exercises zero-padding path).
    x3 = jax.random.normal(kx2, (3, 5, dim), dtype=jnp.float32)
    out3 = jax.block_until_ready(linear_headwise_expand(x3, weight, bias))
    np.testing.assert_allclose(np.asarray(out3), np.asarray(_reference(x3, weight, bias)),
                               rtol=1e-4, atol=1e-4)

    # Multi-tile grid (pipelined path, grid > 1).
    x4 = jax.random.normal(kx2, (4, 1024, dim), dtype=jnp.float32)
    out4 = jax.block_until_ready(linear_headwise_expand(x4, weight, tile_rows=256))
    np.testing.assert_allclose(np.asarray(out4), np.asarray(_reference(x4, weight)),
                               rtol=1e-4, atol=1e-4)

    print("KERNEL_OK")
</pallas_src>

<mosaic_0001>
module attributes {stable_mosaic.version = 11 : i64} {
  func.func @_headwise_matmul_kernel(%arg0: i32, %arg1: memref<4x128xf32, #tpu.memory_space<vmem>>, %arg2: memref<128x128xf32, #tpu.memory_space<vmem>>, %arg3: memref<1x128xf32, #tpu.memory_space<vmem>>, %arg4: memref<4x128xf32, #tpu.memory_space<vmem>>) attributes {dimension_semantics = [#tpu.dimension_semantics<parallel>], iteration_bounds = array<i64: 1>, scalar_prefetch = 0 : i64, scratch_operands = 0 : i64, tpu.core_type = #tpu.core_type<tc>, window_params = [{transform_indices = @transform_0, window_bounds = array<i64: 4, 128>}, {pipeline_mode = #tpu.pipeline_mode<synchronous>, transform_indices = @transform_1, window_bounds = array<i64: 128, 128>}, {pipeline_mode = #tpu.pipeline_mode<synchronous>, transform_indices = @transform_2, window_bounds = array<i64: 1, 128>}, {transform_indices = @transform_3, window_bounds = array<i64: 4, 128>}]} {
    %c0 = arith.constant 0 : index
    %c0_0 = arith.constant 0 : index
    %0 = vector.load %arg1[%c0, %c0_0] : memref<4x128xf32, #tpu.memory_space<vmem>>, vector<4x128xf32>
    %c0_1 = arith.constant 0 : index
    %c0_2 = arith.constant 0 : index
    %1 = vector.load %arg2[%c0_1, %c0_2] : memref<128x128xf32, #tpu.memory_space<vmem>>, vector<128x128xf32>
    %cst = arith.constant dense<0.000000e+00> : vector<4x128xf32>
    %2 = tpu.matmul %0, %1, %cst {dimension_numbers = #tpu.dot_dimension_numbers<[1], [0], [0], [1], [0, 0, 1, 1], [], []>} : vector<4x128xf32>, vector<128x128xf32>, vector<4x128xf32> -> vector<4x128xf32>
    %c0_3 = arith.constant 0 : index
    %c0_4 = arith.constant 0 : index
    %3 = vector.load %arg3[%c0_3, %c0_4] : memref<1x128xf32, #tpu.memory_space<vmem>>, vector<1x128xf32>
    %4 = vector.broadcast %3 : vector<1x128xf32> to vector<4x128xf32>
    %5 = arith.addf %2, %4 : vector<4x128xf32>
    %c0_5 = arith.constant 0 : index
    %c0_6 = arith.constant 0 : index
    %6 = vector.load %arg4[%c0_5, %c0_6] : memref<4x128xf32, #tpu.memory_space<vmem>>, vector<4x128xf32>
    tpu.vector_store %arg4[%c0_5, %c0_6], %5 {strides = array<i32>} : memref<4x128xf32, #tpu.memory_space<vmem>>, vector<4x128xf32>,
    return
  }
  func.func @transform_0(%arg0: i32) -> (i32, i32) {
    %c0_i32 = arith.constant 0 : i32
    %c0_i32_0 = arith.constant 0 : i32
    return %arg0, %c0_i32 : i32, i32
  }
  func.func @transform_1(%arg0: i32) -> (i32, i32) {
    %c0_i32 = arith.constant 0 : i32
    %c0_i32_0 = arith.constant 0 : i32
    %c0_i32_1 = arith.constant 0 : i32
    return %c0_i32, %c0_i32_0 : i32, i32
  }
  func.func @transform_2(%arg0: i32) -> (i32, i32) {
    %c0_i32 = arith.constant 0 : i32
    %c0_i32_0 = arith.constant 0 : i32
    %c0_i32_1 = arith.constant 0 : i32
    return %c0_i32, %c0_i32_0 : i32, i32
  }
  func.func @transform_3(%arg0: i32) -> (i32, i32) {
    %c0_i32 = arith.constant 0 : i32
    %c0_i32_0 = arith.constant 0 : i32
    return %arg0, %c0_i32 : i32, i32
  }
}

</mosaic_0001>

<llo_original>
// kernel: tpu_custom_call.1
$region0: #{tpu_custom_call.1}
  #allocation0 [shape = 'u32[]', space=smem, size = 0x4, offset = 0x4, fixed_abs, tag = 'smem constant byte address 0x4 - core index']
  #allocation1 [shape = 'u32[72,128]{1,0:T(1,128)}', space=vmem, size = 0x9000, scoped, tag = 'internal scratch']
  %s0 = inlined_call_operand.hbm [shape: f32[4,128], index: 0, kind: input, shape index: {}]
  %s1 = inlined_call_operand.hbm [shape: f32[128,128], index: 1, kind: input, shape index: {}]
  %s2 = inlined_call_operand.vmem [shape: f32[1,128], index: 2, kind: input, shape index: {}]
  %s3 = inlined_call_operand.hbm [shape: f32[4,128], index: 3, kind: output, shape index: {}]
  %s4 = sld [smem:[#allocation0]]
  $region30: #{tpu_custom_call.1} parent=0
    _
  %s6 = ssub.s32 1, %s4
  %s7 = scalar_select 0, %s6, %s4
  $region1: #{tpu_custom_call.1} parent=0
    #allocation2 [shape = 'u8[2048]{0}', space=vmem, size = 0x800, scoped, tag = 'input window, operand 0, single buffered']
    #allocation3 [shape = 's32[1]{0}', space=sflag, size = 0x4, scoped, tag = 'scoped memory for tpu_custom_call.1']
    #allocation4 [shape = 's32[1]{0}', space=sflag, size = 0x4, scoped, tag = 'scoped memory for tpu_custom_call.1']
    #allocation5 [shape = 'u8[65536]{0}', space=vmem, size = 0x10000, scoped, tag = 'input window, operand 1, single buffered']
    #allocation6 [shape = 's32[1]{0}', space=sflag, size = 0x4, scoped, tag = 'scoped memory for tpu_custom_call.1']
    #allocation7 [shape = 'u8[2048]{0}', space=vmem, size = 0x800, scoped, tag = 'output window, operand 0, single buffered']
    %8 = vsyncpa [#allocation3], 0
    %9 = vsyncpa [#allocation6], 0
    %10 = vsyncpa [#allocation4], 0
    // Predicated region
    $region2: #{tpu_custom_call.1} parent=1 // pred_check
      _
    $region3: #{tpu_custom_call.1} parent=1 // pred_check_branch
      %12 = sbr.rel (0) target = $region5
    $region4: #{tpu_custom_call.1} parent=1 // pred_region
      %14 = vsyncadd [#allocation3], 0
      %s16 = sshll.u32 %s0, 4
      %s17 = int_to_ptr.hbm [resolvable:$true] %s16
      %s18 = sshll.u32 [#allocation2], 4
      %s19 = int_to_ptr.vmem [resolvable:$true] %s18
      %21 = dma.hbm_to_vmem [thread:$0]  %s17, 64, %s19, [#allocation3]
    $region5: #{tpu_custom_call.1} parent=1 // pred_fallthru
      _
    // Predicated region
    $region6: #{tpu_custom_call.1} parent=1 // pred_check
      _
    $region7: #{tpu_custom_call.1} parent=1 // pred_check_branch
      %23 = sbr.rel (0) target = $region9
    $region8: #{tpu_custom_call.1} parent=1 // pred_region
      %25 = vsyncadd [#allocation6], 0
      %s26 = sshll.u32 %s1, 4
      %s27 = int_to_ptr.hbm [resolvable:$true] %s26
      %s28 = sshll.u32 [#allocation5], 4
      %s29 = int_to_ptr.vmem [resolvable:$true] %s28
      %34 = dma.hbm_to_vmem [thread:$0]  %s27, 2048, %s29, [#allocation6], 128, 128, 8
    $region9: #{tpu_custom_call.1} parent=1 // pred_fallthru
      _
    // Predicated region
    $region10: #{tpu_custom_call.1} parent=1 // pred_check
      _
    $region11: #{tpu_custom_call.1} parent=1 // pred_check_branch
      %36 = sbr.rel (0) target = $region13
    $region12: #{tpu_custom_call.1} parent=1 // pred_region
      _
    $region13: #{tpu_custom_call.1} parent=1 // pred_fallthru
      _
    // Predicated region
    $region14: #{tpu_custom_call.1} parent=1 // pred_check
      _
    $region15: #{tpu_custom_call.1} parent=1 // pred_check_branch
      %38 = sbr.rel (0) target = $region17
    $region16: #{tpu_custom_call.1} parent=1 // pred_region
      %40 = dma.done [#allocation3], 64
    $region17: #{tpu_custom_call.1} parent=1 // pred_fallthru
      _
    // Predicated region
    $region18: #{tpu_custom_call.1} parent=1 // pred_check
      _
    $region19: #{tpu_custom_call.1} parent=1 // pred_check_branch
      %42 = sbr.rel (0) target = $region21
    $region20: #{tpu_custom_call.1} parent=1 // pred_region
      %44 = dma.done [#allocation6], 2048
    $region21: #{tpu_custom_call.1} parent=1 // pred_fallthru
      _
    %v45 = vld [vmem:[#allocation2] sm:$0xf]
    %v46 = vld [vmem:[#allocation5] sm:$0xff]
    %v47 = vld [vmem:[#allocation5 + $0x8] sm:$0xff]
    %v48 = vld [vmem:[#allocation5 + $0x10] sm:$0xff]
    %v49 = vld [vmem:[#allocation5 + $0x18] sm:$0xff]
    %v50 = vld [vmem:[#allocation5 + $0x20] sm:$0xff]
    %v51 = vld [vmem:[#allocation5 + $0x28] sm:$0xff]
    %v52 = vld [vmem:[#allocation5 + $0x30] sm:$0xff]
    %v53 = vld [vmem:[#allocation5 + $0x38] sm:$0xff]
    %v54 = vld [vmem:[#allocation5 + $0x40] sm:$0xff]
    %v55 = vld [vmem:[#allocation5 + $0x48] sm:$0xff]
    %v56 = vld [vmem:[#allocation5 + $0x50] sm:$0xff]
    %v57 = vld [vmem:[#allocation5 + $0x58] sm:$0xff]
    %v58 = vld [vmem:[#allocation5 + $0x60] sm:$0xff]
    %v59 = vld [vmem:[#allocation5 + $0x68] sm:$0xff]
    %v60 = vld [vmem:[#allocation5 + $0x70] sm:$0xff]
    %v61 = vld [vmem:[#allocation5 + $0x78] sm:$0xff]
    %v62 = vld [vmem:[%s2] sm:$0x1]
    %v64 = vperm.slane %v62, 0
    %66 = vmatpush.msra.mxu0 %v61
    %67 = vmatpush.msra.mxu0 %v60
    %68 = vmatpush.msra.mxu0 %v59
    %69 = vmatpush.msra.mxu0 %v58
    %70 = vmatpush.msra.mxu0 %v57
    %71 = vmatpush.msra.mxu0 %v56
    %72 = vmatpush.msra.mxu0 %v55
    %73 = vmatpush.msra.mxu0 %v54
    %74 = vmatpush.msra.mxu0 %v53
    %75 = vmatpush.msra.mxu0 %v52
    %76 = vmatpush.msra.mxu0 %v51
    %77 = vmatpush.msra.mxu0 %v50
    %78 = vmatpush.msra.mxu0 %v49
    %79 = vmatpush.msra.mxu0 %v48
    %80 = vmatpush.msra.mxu0 %v47
    %81 = vmatpush.msra.mxu0 %v46
    %82 = vmatmul.f32.gmra.mxu0 %v45
    %v83 = vpop.f32.mrf.mxu0
    %v84 = vadd.f32 %v64, %v83
    %85 = vdwg.mxu0
    %86 = vst [vmem:[#allocation7] sm:$0xf] %v84
    // Predicated region
    $region22: #{tpu_custom_call.1} parent=1 // pred_check
      _
    $region23: #{tpu_custom_call.1} parent=1 // pred_check_branch
      %88 = sbr.rel (0) target = $region25
    $region24: #{tpu_custom_call.1} parent=1 // pred_region
      %90 = vsyncadd [#allocation4], 0
      %s92 = sshll.u32 [#allocation7], 4
      %s93 = int_to_ptr.vmem [resolvable:$true] %s92
      %s94 = sshll.u32 %s3, 4
      %s95 = int_to_ptr.hbm [resolvable:$true] %s94
      %97 = dma.vmem_to_hbm [thread:$0]  %s93, 64, %s95, [#allocation4]
    $region25: #{tpu_custom_call.1} parent=1 // pred_fallthru
      _
    // Predicated region
    $region26: #{tpu_custom_call.1} parent=1 // pred_check
      _
    $region27: #{tpu_custom_call.1} parent=1 // pred_check_branch
      %99 = sbr.rel (0) target = $region29
    $region28: #{tpu_custom_call.1} parent=1 // pred_region
      %101 = dma.done [#allocation4], 64
    $region29: #{tpu_custom_call.1} parent=1 // pred_fallthru
      _
    %102 = vsyncpa [#allocation3], 1
    %103 = vsyncpa [#allocation6], 1
    %104 = vsyncpa [#allocation4], 1

</llo_original>
